<compile_context>
chip_gen: v5e
topology: v5e:2x2
jax: 0.10.0
libtpu: 0.0.40
codegen_flags: <defaults>
</compile_context>

<pallas_src>
import jax
import jax.numpy as jnp
from jax.experimental import pallas as pl
from jax.experimental.pallas import tpu as pltpu


def _g_m10_kernel(x_ref, w1_ref, b1_ref, w2_ref, b2_ref, w3_ref, b3_ref,
                  w4_ref, b4_ref, w5_ref, b5_ref, out_ref):
    # All tensors are feature-major: x_ref is (10, TB), h is (feat, TB),
    # weights are PyTorch-native (out, in), biases are (out, 1).
    # fc1 + ReLU : (100, 10) @ (10, TB)
    h = jnp.dot(w1_ref[...], x_ref[...], preferred_element_type=jnp.float32)
    h = jnp.maximum(h + b1_ref[...], 0.0)
    # fc2 + ReLU : (100, 100) @ (100, TB)
    h = jnp.dot(w2_ref[...], h, preferred_element_type=jnp.float32)
    h = jnp.maximum(h + b2_ref[...], 0.0)
    # fc3 + ReLU : (100, 100) @ (100, TB)
    h = jnp.dot(w3_ref[...], h, preferred_element_type=jnp.float32)
    h = jnp.maximum(h + b3_ref[...], 0.0)
    # fc4 + ReLU : (50, 100) @ (100, TB)
    h = jnp.dot(w4_ref[...], h, preferred_element_type=jnp.float32)
    h = jnp.maximum(h + b4_ref[...], 0.0)
    # fc5 (no ReLU) : (10, 50) @ (50, TB)
    y = jnp.dot(w5_ref[...], h, preferred_element_type=jnp.float32)
    out_ref[...] = (y + b5_ref[...]).astype(out_ref.dtype)


def _pick_tile(B, tb):
    """Batch tile: multiple of 128, and at least 2 grid steps when B allows it
    (so 'parallel' can shard across v7x's two TensorCores)."""
    if B <= 128:
        return B                      # block == full dim: always legal
    half = max(128, (B // 2) // 128 * 128)
    return min(tb, half)


def g_m10_forward(x, params, *, tb=4096):
    """x: (B, 10) f32. params: PyTorch-native (w (out,in), b (out,)) x 5.
    Returns (B, 10) f32, same math as the PyTorch module (y = x @ W.T + b)."""
    assert tb > 0 and tb % 128 == 0, "tb must be a positive multiple of 128"
    (w1, b1, w2, b2, w3, b3, w4, b4, w5, b5) = params
    B, d_in = x.shape
    d_out = w5.shape[0]

    # Batch-on-lanes: present the input feature-major.
    xT = x.T                                           # (10, B)

    TB = _pick_tile(B, tb)
    grid = (pl.cdiv(B, TB),)                           # ragged last block is masked

    # Biases as (out, 1) so they broadcast along the lane (batch) axis.
    b1c = b1.reshape(-1, 1)
    b2c = b2.reshape(-1, 1)
    b3c = b3.reshape(-1, 1)
    b4c = b4.reshape(-1, 1)
    b5c = b5.reshape(-1, 1)

    def _resident(arr):
        # Full array, same block index every step -> VMEM-resident, no re-DMA.
        return pl.BlockSpec(arr.shape, lambda i: (0, 0))

    outT = pl.pallas_call(
        _g_m10_kernel,
        out_shape=jax.ShapeDtypeStruct((d_out, B), jnp.float32),
        grid=grid,
        in_specs=[
            pl.BlockSpec((d_in, TB), lambda i: (0, i)),   # streamed x^T tiles
            _resident(w1), _resident(b1c),
            _resident(w2), _resident(b2c),
            _resident(w3), _resident(b3c),
            _resident(w4), _resident(b4c),
            _resident(w5), _resident(b5c),
        ],
        out_specs=pl.BlockSpec((d_out, TB), lambda i: (0, i)),
        compiler_params=pltpu.CompilerParams(
            dimension_semantics=("parallel",),   # megacore sharding on v7x
            # no vmem_limit override: working set is a few MB, defaults are ample
        ),
    )(xT, w1, b1c, w2, b2c, w3, b3c, w4, b4c, w5, b5c)

    return outT.T                                       # back to (B, 10)


def _init_params(key):
    """Deterministic init mirroring nn.Linear: U(-1/sqrt(fan_in), 1/sqrt(fan_in)).
    Weights stored PyTorch-native as (out, in), biases as (out,)."""
    dims = [(10, 100), (100, 100), (100, 100), (100, 50), (50, 10)]
    keys = jax.random.split(key, 2 * len(dims))
    params = []
    for idx, (fan_in, fan_out) in enumerate(dims):
        lim = 1.0 / jnp.sqrt(float(fan_in))
        w = jax.random.uniform(keys[2 * idx], (fan_out, fan_in),
                               jnp.float32, -lim, lim)
        b = jax.random.uniform(keys[2 * idx + 1], (fan_out,),
                               jnp.float32, -lim, lim)
        params += [w, b]
    return tuple(params)


def _reference(x, params):
    """Pure-JAX reference with the exact PyTorch semantics (y = x @ W.T + b)."""
    w1, b1, w2, b2, w3, b3, w4, b4, w5, b5 = params
    h = jnp.maximum(x @ w1.T + b1, 0.0)
    h = jnp.maximum(h @ w2.T + b2, 0.0)
    h = jnp.maximum(h @ w3.T + b3, 0.0)
    h = jnp.maximum(h @ w4.T + b4, 0.0)
    return h @ w5.T + b5


if __name__ == "__main__":
    key = jax.random.PRNGKey(0)
    kx, kx2, kp = jax.random.split(key, 3)
    params = _init_params(kp)

    # Main check: B = 256 -> TB = 128, 2 grid steps (exercises the pipeline +
    # the 2-TensorCore 'parallel' path on v7x).
    B = 256
    x = jax.random.normal(kx, (B, 10), jnp.float32)
    out = g_m10_forward(x, params)
    jax.block_until_ready(out)
    ref = _reference(x, params)
    assert out.shape == (B, 10)
    assert jnp.allclose(out, ref, atol=1e-5, rtol=1e-5)

    # Ragged-B check: B = 200 -> TB = 128, last block is partial and its OOB
    # lanes are masked on write (no padding / slicing in the wrapper).
    B2 = 200
    x2 = jax.random.normal(kx2, (B2, 10), jnp.float32)
    out2 = g_m10_forward(x2, params)
    jax.block_until_ready(out2)
    assert out2.shape == (B2, 10)
    assert jnp.allclose(out2, _reference(x2, params), atol=1e-5, rtol=1e-5)

    print("KERNEL_OK")
</pallas_src>

<mosaic_0001>
module attributes {stable_mosaic.version = 11 : i64} {
  func.func @_g_m10_kernel(%arg0: i32, %arg1: memref<10x128xf32, #tpu.memory_space<vmem>>, %arg2: memref<100x10xf32, #tpu.memory_space<vmem>>, %arg3: memref<100x1xf32, #tpu.memory_space<vmem>>, %arg4: memref<100x100xf32, #tpu.memory_space<vmem>>, %arg5: memref<100x1xf32, #tpu.memory_space<vmem>>, %arg6: memref<100x100xf32, #tpu.memory_space<vmem>>, %arg7: memref<100x1xf32, #tpu.memory_space<vmem>>, %arg8: memref<50x100xf32, #tpu.memory_space<vmem>>, %arg9: memref<50x1xf32, #tpu.memory_space<vmem>>, %arg10: memref<10x50xf32, #tpu.memory_space<vmem>>, %arg11: memref<10x1xf32, #tpu.memory_space<vmem>>, %arg12: memref<10x128xf32, #tpu.memory_space<vmem>>) attributes {dimension_semantics = [#tpu.dimension_semantics<parallel>], iteration_bounds = array<i64: 2>, scalar_prefetch = 0 : i64, scratch_operands = 0 : i64, tpu.core_type = #tpu.core_type<tc>, window_params = [{transform_indices = @transform_0, window_bounds = array<i64: 10, 128>}, {pipeline_mode = #tpu.pipeline_mode<synchronous>, transform_indices = @transform_1, window_bounds = array<i64: 100, 10>}, {pipeline_mode = #tpu.pipeline_mode<synchronous>, transform_indices = @transform_2, window_bounds = array<i64: 100, 1>}, {pipeline_mode = #tpu.pipeline_mode<synchronous>, transform_indices = @transform_3, window_bounds = array<i64: 100, 100>}, {pipeline_mode = #tpu.pipeline_mode<synchronous>, transform_indices = @transform_4, window_bounds = array<i64: 100, 1>}, {pipeline_mode = #tpu.pipeline_mode<synchronous>, transform_indices = @transform_5, window_bounds = array<i64: 100, 100>}, {pipeline_mode = #tpu.pipeline_mode<synchronous>, transform_indices = @transform_6, window_bounds = array<i64: 100, 1>}, {pipeline_mode = #tpu.pipeline_mode<synchronous>, transform_indices = @transform_7, window_bounds = array<i64: 50, 100>}, {pipeline_mode = #tpu.pipeline_mode<synchronous>, transform_indices = @transform_8, window_bounds = array<i64: 50, 1>}, {pipeline_mode = #tpu.pipeline_mode<synchronous>, transform_indices = @transform_9, window_bounds = array<i64: 10, 50>}, {pipeline_mode = #tpu.pipeline_mode<synchronous>, transform_indices = @transform_10, window_bounds = array<i64: 10, 1>}, {transform_indices = @transform_11, window_bounds = array<i64: 10, 128>}]} {
    %c0 = arith.constant 0 : index
    %c0_0 = arith.constant 0 : index
    %0 = vector.load %arg2[%c0, %c0_0] : memref<100x10xf32, #tpu.memory_space<vmem>>, vector<100x10xf32>
    %c0_1 = arith.constant 0 : index
    %c0_2 = arith.constant 0 : index
    %1 = vector.load %arg1[%c0_1, %c0_2] : memref<10x128xf32, #tpu.memory_space<vmem>>, vector<10x128xf32>
    %cst = arith.constant dense<0.000000e+00> : vector<100x128xf32>
    %2 = tpu.matmul %0, %1, %cst {dimension_numbers = #tpu.dot_dimension_numbers<[1], [0], [0], [1], [0, 0, 1, 1], [], []>} : vector<100x10xf32>, vector<10x128xf32>, vector<100x128xf32> -> vector<100x128xf32>
    %c0_3 = arith.constant 0 : index
    %c0_4 = arith.constant 0 : index
    %3 = vector.load %arg3[%c0_3, %c0_4] : memref<100x1xf32, #tpu.memory_space<vmem>>, vector<100x1xf32>
    %4 = vector.broadcast %3 : vector<100x1xf32> to vector<100x128xf32>
    %5 = arith.addf %2, %4 : vector<100x128xf32>
    %cst_5 = arith.constant 0.000000e+00 : f32
    %6 = vector.broadcast %cst_5 : f32 to vector<100x128xf32>
    %7 = arith.maximumf %5, %6 : vector<100x128xf32>
    %c0_6 = arith.constant 0 : index
    %c0_7 = arith.constant 0 : index
    %8 = vector.load %arg4[%c0_6, %c0_7] : memref<100x100xf32, #tpu.memory_space<vmem>>, vector<100x100xf32>
    %cst_8 = arith.constant dense<0.000000e+00> : vector<100x128xf32>
    %9 = tpu.matmul %8, %7, %cst_8 {dimension_numbers = #tpu.dot_dimension_numbers<[1], [0], [0], [1], [0, 0, 1, 1], [], []>} : vector<100x100xf32>, vector<100x128xf32>, vector<100x128xf32> -> vector<100x128xf32>
    %c0_9 = arith.constant 0 : index
    %c0_10 = arith.constant 0 : index
    %10 = vector.load %arg5[%c0_9, %c0_10] : memref<100x1xf32, #tpu.memory_space<vmem>>, vector<100x1xf32>
    %11 = vector.broadcast %10 : vector<100x1xf32> to vector<100x128xf32>
    %12 = arith.addf %9, %11 : vector<100x128xf32>
    %cst_11 = arith.constant 0.000000e+00 : f32
    %13 = vector.broadcast %cst_11 : f32 to vector<100x128xf32>
    %14 = arith.maximumf %12, %13 : vector<100x128xf32>
    %c0_12 = arith.constant 0 : index
    %c0_13 = arith.constant 0 : index
    %15 = vector.load %arg6[%c0_12, %c0_13] : memref<100x100xf32, #tpu.memory_space<vmem>>, vector<100x100xf32>
    %cst_14 = arith.constant dense<0.000000e+00> : vector<100x128xf32>
    %16 = tpu.matmul %15, %14, %cst_14 {dimension_numbers = #tpu.dot_dimension_numbers<[1], [0], [0], [1], [0, 0, 1, 1], [], []>} : vector<100x100xf32>, vector<100x128xf32>, vector<100x128xf32> -> vector<100x128xf32>
    %c0_15 = arith.constant 0 : index
    %c0_16 = arith.constant 0 : index
    %17 = vector.load %arg7[%c0_15, %c0_16] : memref<100x1xf32, #tpu.memory_space<vmem>>, vector<100x1xf32>
    %18 = vector.broadcast %17 : vector<100x1xf32> to vector<100x128xf32>
    %19 = arith.addf %16, %18 : vector<100x128xf32>
    %cst_17 = arith.constant 0.000000e+00 : f32
    %20 = vector.broadcast %cst_17 : f32 to vector<100x128xf32>
    %21 = arith.maximumf %19, %20 : vector<100x128xf32>
    %c0_18 = arith.constant 0 : index
    %c0_19 = arith.constant 0 : index
    %22 = vector.load %arg8[%c0_18, %c0_19] : memref<50x100xf32, #tpu.memory_space<vmem>>, vector<50x100xf32>
    %cst_20 = arith.constant dense<0.000000e+00> : vector<50x128xf32>
    %23 = tpu.matmul %22, %21, %cst_20 {dimension_numbers = #tpu.dot_dimension_numbers<[1], [0], [0], [1], [0, 0, 1, 1], [], []>} : vector<50x100xf32>, vector<100x128xf32>, vector<50x128xf32> -> vector<50x128xf32>
    %c0_21 = arith.constant 0 : index
    %c0_22 = arith.constant 0 : index
    %24 = vector.load %arg9[%c0_21, %c0_22] : memref<50x1xf32, #tpu.memory_space<vmem>>, vector<50x1xf32>
    %25 = vector.broadcast %24 : vector<50x1xf32> to vector<50x128xf32>
    %26 = arith.addf %23, %25 : vector<50x128xf32>
    %cst_23 = arith.constant 0.000000e+00 : f32
    %27 = vector.broadcast %cst_23 : f32 to vector<50x128xf32>
    %28 = arith.maximumf %26, %27 : vector<50x128xf32>
    %c0_24 = arith.constant 0 : index
    %c0_25 = arith.constant 0 : index
    %29 = vector.load %arg10[%c0_24, %c0_25] : memref<10x50xf32, #tpu.memory_space<vmem>>, vector<10x50xf32>
    %cst_26 = arith.constant dense<0.000000e+00> : vector<10x128xf32>
    %30 = tpu.matmul %29, %28, %cst_26 {dimension_numbers = #tpu.dot_dimension_numbers<[1], [0], [0], [1], [0, 0, 1, 1], [], []>} : vector<10x50xf32>, vector<50x128xf32>, vector<10x128xf32> -> vector<10x128xf32>
    %c0_27 = arith.constant 0 : index
    %c0_28 = arith.constant 0 : index
    %31 = vector.load %arg11[%c0_27, %c0_28] : memref<10x1xf32, #tpu.memory_space<vmem>>, vector<10x1xf32>
    %32 = vector.broadcast %31 : vector<10x1xf32> to vector<10x128xf32>
    %33 = arith.addf %30, %32 : vector<10x128xf32>
    %c0_29 = arith.constant 0 : index
    %c0_30 = arith.constant 0 : index
    %34 = vector.load %arg12[%c0_29, %c0_30] : memref<10x128xf32, #tpu.memory_space<vmem>>, vector<10x128xf32>
    tpu.vector_store %arg12[%c0_29, %c0_30], %33 {strides = array<i32>} : memref<10x128xf32, #tpu.memory_space<vmem>>, vector<10x128xf32>,
    return
  }
  func.func @transform_0(%arg0: i32) -> (i32, i32) {
    %c0_i32 = arith.constant 0 : i32
    %c0_i32_0 = arith.constant 0 : i32
    return %c0_i32, %arg0 : i32, i32
  }
  func.func @transform_1(%arg0: i32) -> (i32, i32) {
    %c0_i32 = arith.constant 0 : i32
    %c0_i32_0 = arith.constant 0 : i32
    %c0_i32_1 = arith.constant 0 : i32
    return %c0_i32, %c0_i32_0 : i32, i32
  }
  func.func @transform_2(%arg0: i32) -> (i32, i32) {
    %c0_i32 = arith.constant 0 : i32
    %c0_i32_0 = arith.constant 0 : i32
    %c0_i32_1 = arith.constant 0 : i32
    return %c0_i32, %c0_i32_0 : i32, i32
  }
  func.func @transform_3(%arg0: i32) -> (i32, i32) {
    %c0_i32 = arith.constant 0 : i32
    %c0_i32_0 = arith.constant 0 : i32
    %c0_i32_1 = arith.constant 0 : i32
    return %c0_i32, %c0_i32_0 : i32, i32
  }
  func.func @transform_4(%arg0: i32) -> (i32, i32) {
    %c0_i32 = arith.constant 0 : i32
    %c0_i32_0 = arith.constant 0 : i32
    %c0_i32_1 = arith.constant 0 : i32
    return %c0_i32, %c0_i32_0 : i32, i32
  }
  func.func @transform_5(%arg0: i32) -> (i32, i32) {
    %c0_i32 = arith.constant 0 : i32
    %c0_i32_0 = arith.constant 0 : i32
    %c0_i32_1 = arith.constant 0 : i32
    return %c0_i32, %c0_i32_0 : i32, i32
  }
  func.func @transform_6(%arg0: i32) -> (i32, i32) {
    %c0_i32 = arith.constant 0 : i32
    %c0_i32_0 = arith.constant 0 : i32
    %c0_i32_1 = arith.constant 0 : i32
    return %c0_i32, %c0_i32_0 : i32, i32
  }
  func.func @transform_7(%arg0: i32) -> (i32, i32) {
    %c0_i32 = arith.constant 0 : i32
    %c0_i32_0 = arith.constant 0 : i32
    %c0_i32_1 = arith.constant 0 : i32
    return %c0_i32, %c0_i32_0 : i32, i32
  }
  func.func @transform_8(%arg0: i32) -> (i32, i32) {
    %c0_i32 = arith.constant 0 : i32
    %c0_i32_0 = arith.constant 0 : i32
    %c0_i32_1 = arith.constant 0 : i32
    return %c0_i32, %c0_i32_0 : i32, i32
  }
  func.func @transform_9(%arg0: i32) -> (i32, i32) {
    %c0_i32 = arith.constant 0 : i32
    %c0_i32_0 = arith.constant 0 : i32
    %c0_i32_1 = arith.constant 0 : i32
    return %c0_i32, %c0_i32_0 : i32, i32
  }
  func.func @transform_10(%arg0: i32) -> (i32, i32) {
    %c0_i32 = arith.constant 0 : i32
    %c0_i32_0 = arith.constant 0 : i32
    %c0_i32_1 = arith.constant 0 : i32
    return %c0_i32, %c0_i32_0 : i32, i32
  }
  func.func @transform_11(%arg0: i32) -> (i32, i32) {
    %c0_i32 = arith.constant 0 : i32
    %c0_i32_0 = arith.constant 0 : i32
    return %c0_i32, %arg0 : i32, i32
  }
}

</mosaic_0001>

<llo_original>
// kernel: tpu_custom_call.1
$region0: #{tpu_custom_call.1}
  #allocation0 [shape = 'u32[]', space=smem, size = 0x4, offset = 0x4, fixed_abs, tag = 'smem constant byte address 0x4 - core index']
  #allocation1 [shape = 'u32[72,128]{1,0:T(1,128)}', space=vmem, size = 0x9000, scoped, tag = 'internal scratch']
  %s0 = inlined_call_operand.vmem [shape: f32[10,256], index: 0, kind: input, shape index: {}]
  %s1 = inlined_call_operand.vmem [shape: f32[100,10], index: 1, kind: input, shape index: {}]
  %s2 = inlined_call_operand.vmem [shape: f32[100,1], index: 2, kind: input, shape index: {}]
  %s3 = inlined_call_operand.vmem [shape: f32[100,100], index: 3, kind: input, shape index: {}]
  %s4 = inlined_call_operand.vmem [shape: f32[100,1], index: 4, kind: input, shape index: {}]
  %s5 = inlined_call_operand.vmem [shape: f32[100,100], index: 5, kind: input, shape index: {}]
  %s6 = inlined_call_operand.vmem [shape: f32[100,1], index: 6, kind: input, shape index: {}]
  %s7 = inlined_call_operand.vmem [shape: f32[50,100], index: 7, kind: input, shape index: {}]
  %s8 = inlined_call_operand.vmem [shape: f32[50,1], index: 8, kind: input, shape index: {}]
  %s9 = inlined_call_operand.vmem [shape: f32[10,50], index: 9, kind: input, shape index: {}]
  %s10 = inlined_call_operand.vmem [shape: f32[10,1], index: 10, kind: input, shape index: {}]
  %s11 = inlined_call_operand.hbm [shape: f32[10,256], index: 11, kind: output, shape index: {}]
  %s12 = sld [smem:[#allocation0]]
  $region115: #{tpu_custom_call.1} parent=0
    _
  %s14 = ssub.s32 1, %s12
  %s15 = scalar_select 0, %s14, %s12
  $region1: #{tpu_custom_call.1} parent=0
    #allocation2 [shape = 'u8[16384]{0}', space=vmem, size = 0x4000, scoped, tag = 'input window, operand 0']
    #allocation3 [shape = 'u8[16384]{0}', space=vmem, size = 0x4000, scoped, tag = 'output window, operand 0']
    #allocation4 [shape = 's32[2]{0}', space=sflag, size = 0x8, scoped, tag = 'scoped memory for tpu_custom_call.1']
    %16 = vsyncpa [#allocation4], 0
    %s17 = scalar_lea.sflag [#allocation4], 1
    %18 = vsyncpa %s17, 0
    loop: start=0, step=1, limit=4
    $region2: #{tpu_custom_call.1} parent=1 // loop_pre_header
      _
    $region3: #{tpu_custom_call.1} parent=1 // loop_header
      %s20 = sphi 0, %s24
      %p21 = scmp.ge.s32.totalorder %s20, 4
      %s30 = sphi 0, %s32
      %s33 = sphi 0, %s30
      %s34 = sphi 0, %s33
      %s50 = sphi 0, %s34
      %s54 = sphi 0, %s54
      %s56 = sphi 0, %s54
      %s57 = sphi 0, %s56
      %s71 = sphi 0, %s57
      %s75 = sphi 0, %s75
      %s77 = sphi 0, %s75
      %s78 = sphi 0, %s77
      %s92 = sphi 0, %s78
      %s96 = sphi 0, %s96
      %s98 = sphi 0, %s96
      %s99 = sphi 0, %s98
      %s113 = sphi 0, %s99
      %s117 = sphi 0, %s117
      %s119 = sphi 0, %s117
      %s120 = sphi 0, %s119
      %s134 = sphi 0, %s120
      %s138 = sphi 0, %s138
      %s140 = sphi 0, %s138
      %s141 = sphi 0, %s140
      %s155 = sphi 0, %s141
      %s159 = sphi 0, %s159
      %s161 = sphi 0, %s159
      %s162 = sphi 0, %s161
      %s176 = sphi 0, %s162
      %s180 = sphi 0, %s180
      %s182 = sphi 0, %s180
      %s183 = sphi 0, %s182
      %s197 = sphi 0, %s183
      %s201 = sphi 0, %s201
      %s203 = sphi 0, %s201
      %s204 = sphi 0, %s203
      %s218 = sphi 0, %s204
      %s222 = sphi 0, %s222
      %s224 = sphi 0, %s222
      %s225 = sphi 0, %s224
      %s239 = sphi 0, %s225
      %s243 = sphi 0, %s243
      %s245 = sphi 0, %s243
      %s246 = sphi 0, %s245
      %s260 = sphi 0, %s246
      %s266 = sphi 0, %s268
      %s269 = sphi 0, %s266
      %s270 = sphi 0, %s269
      %s286 = sphi 0, %s270
    $region4: #{tpu_custom_call.1} parent=1 // loop_header_branch
      %23 = sbr.rel (%p21) target = $region8
    $region5: #{tpu_custom_call.1} parent=1 // loop_body
      %s25 = ssub.s32 %s20, 1
      %s26 = ssub.s32 %s20, 2
      %s27 = sadd.s32 %s20, 1
      %s28 = ssub.s32 %s20, %s27
      %p29 = scmp.eq.s32.totalorder %s28, 0
      %s31 = sadd.s32 %s30, 1
      %s32 = scalar_select %p29, %s30, %s31
      %p35 = pneg %p29
      %p36 = scmp.eq.s32.totalorder %s20, 1
      %p37 = por %p35, %p36
      %p38 = scmp.ne.s32.totalorder %s30, %s33
      %p39 = scmp.eq.s32.totalorder %s20, 0
      %p40 = por %p38, %p39
      %p41 = scmp.ne.s32.totalorder %s30, %s33
      %p42 = scmp.eq.s32.totalorder %s25, 1
      %p43 = por %p41, %p42
      %p44 = scmp.ne.s32.totalorder %s33, %s34
      %p45 = scmp.eq.s32.totalorder %s25, 0
      %p46 = por %p44, %p45
      %p47 = scmp.ne.s32.totalorder %s33, %s34
      %p48 = scmp.eq.s32.totalorder %s26, 1
      %p49 = por %p47, %p48
      %p51 = scmp.ne.s32.totalorder %s34, %s50
      %p52 = scmp.eq.s32.totalorder %s26, 0
      %p53 = por %p51, %p52
      %s55 = sadd.s32 %s54, 1
      %p58 = scmp.eq.s32.totalorder %s20, 1
      %p59 = scmp.ne.s32.totalorder %s54, %s56
      %p60 = scmp.eq.s32.totalorder %s20, 0
      %p61 = por %p59, %p60
      %p62 = scmp.ne.s32.totalorder %s54, %s56
      %p63 = scmp.eq.s32.totalorder %s25, 1
      %p64 = por %p62, %p63
      %p65 = scmp.ne.s32.totalorder %s56, %s57
      %p66 = scmp.eq.s32.totalorder %s25, 0
      %p67 = por %p65, %p66
      %p68 = scmp.ne.s32.totalorder %s56, %s57
      %p69 = scmp.eq.s32.totalorder %s26, 1
      %p70 = por %p68, %p69
      %p72 = scmp.ne.s32.totalorder %s57, %s71
      %p73 = scmp.eq.s32.totalorder %s26, 0
      %p74 = por %p72, %p73
      %s76 = sadd.s32 %s75, 1
      %p79 = scmp.eq.s32.totalorder %s20, 1
      %p80 = scmp.ne.s32.totalorder %s75, %s77
      %p81 = scmp.eq.s32.totalorder %s20, 0
      %p82 = por %p80, %p81
      %p83 = scmp.ne.s32.totalorder %s75, %s77
      %p84 = scmp.eq.s32.totalorder %s25, 1
      %p85 = por %p83, %p84
      %p86 = scmp.ne.s32.totalorder %s77, %s78
      %p87 = scmp.eq.s32.totalorder %s25, 0
      %p88 = por %p86, %p87
      %p89 = scmp.ne.s32.totalorder %s77, %s78
      %p90 = scmp.eq.s32.totalorder %s26, 1
      %p91 = por %p89, %p90
      %p93 = scmp.ne.s32.totalorder %s78, %s92
      %p94 = scmp.eq.s32.totalorder %s26, 0
      %p95 = por %p93, %p94
      %s97 = sadd.s32 %s96, 1
      %p100 = scmp.eq.s32.totalorder %s20, 1
      %p101 = scmp.ne.s32.totalorder %s96, %s98
      %p102 = scmp.eq.s32.totalorder %s20, 0
      %p103 = por %p101, %p102
      %p104 = scmp.ne.s32.totalorder %s96, %s98
      %p105 = scmp.eq.s32.totalorder %s25, 1
      %p106 = por %p104, %p105
      %p107 = scmp.ne.s32.totalorder %s98, %s99
      %p108 = scmp.eq.s32.totalorder %s25, 0
      %p109 = por %p107, %p108
      %p110 = scmp.ne.s32.totalorder %s98, %s99
      %p111 = scmp.eq.s32.totalorder %s26, 1
      %p112 = por %p110, %p111
      %p114 = scmp.ne.s32.totalorder %s99, %s113
      %p115 = scmp.eq.s32.totalorder %s26, 0
      %p116 = por %p114, %p115
      %s118 = sadd.s32 %s117, 1
      %p121 = scmp.eq.s32.totalorder %s20, 1
      %p122 = scmp.ne.s32.totalorder %s117, %s119
      %p123 = scmp.eq.s32.totalorder %s20, 0
      %p124 = por %p122, %p123
      %p125 = scmp.ne.s32.totalorder %s117, %s119
      %p126 = scmp.eq.s32.totalorder %s25, 1
      %p127 = por %p125, %p126
      %p128 = scmp.ne.s32.totalorder %s119, %s120
      %p129 = scmp.eq.s32.totalorder %s25, 0
      %p130 = por %p128, %p129
      %p131 = scmp.ne.s32.totalorder %s119, %s120
      %p132 = scmp.eq.s32.totalorder %s26, 1
      %p133 = por %p131, %p132
      %p135 = scmp.ne.s32.totalorder %s120, %s134
      %p136 = scmp.eq.s32.totalorder %s26, 0
      %p137 = por %p135, %p136
      %s139 = sadd.s32 %s138, 1
      %p142 = scmp.eq.s32.totalorder %s20, 1
      %p143 = scmp.ne.s32.totalorder %s138, %s140
      %p144 = scmp.eq.s32.totalorder %s20, 0
      %p145 = por %p143, %p144
      %p146 = scmp.ne.s32.totalorder %s138, %s140
      %p147 = scmp.eq.s32.totalorder %s25, 1
      %p148 = por %p146, %p147
      %p149 = scmp.ne.s32.totalorder %s140, %s141
      %p150 = scmp.eq.s32.totalorder %s25, 0
      %p151 = por %p149, %p150
      %p152 = scmp.ne.s32.totalorder %s140, %s141
      %p153 = scmp.eq.s32.totalorder %s26, 1
      %p154 = por %p152, %p153
      %p156 = scmp.ne.s32.totalorder %s141, %s155
      %p157 = scmp.eq.s32.totalorder %s26, 0
      %p158 = por %p156, %p157
      %s160 = sadd.s32 %s159, 1
      %p163 = scmp.eq.s32.totalorder %s20, 1
      %p164 = scmp.ne.s32.totalorder %s159, %s161
      %p165 = scmp.eq.s32.totalorder %s20, 0
      %p166 = por %p164, %p165
      %p167 = scmp.ne.s32.totalorder %s159, %s161
      %p168 = scmp.eq.s32.totalorder %s25, 1
      %p169 = por %p167, %p168
      %p170 = scmp.ne.s32.totalorder %s161, %s162
      %p171 = scmp.eq.s32.totalorder %s25, 0
      %p172 = por %p170, %p171
      %p173 = scmp.ne.s32.totalorder %s161, %s162
      %p174 = scmp.eq.s32.totalorder %s26, 1
      %p175 = por %p173, %p174
      %p177 = scmp.ne.s32.totalorder %s162, %s176
      %p178 = scmp.eq.s32.totalorder %s26, 0
      %p179 = por %p177, %p178
      %s181 = sadd.s32 %s180, 1
      %p184 = scmp.eq.s32.totalorder %s20, 1
      %p185 = scmp.ne.s32.totalorder %s180, %s182
      %p186 = scmp.eq.s32.totalorder %s20, 0
      %p187 = por %p185, %p186
      %p188 = scmp.ne.s32.totalorder %s180, %s182
      %p189 = scmp.eq.s32.totalorder %s25, 1
      %p190 = por %p188, %p189
      %p191 = scmp.ne.s32.totalorder %s182, %s183
      %p192 = scmp.eq.s32.totalorder %s25, 0
      %p193 = por %p191, %p192
      %p194 = scmp.ne.s32.totalorder %s182, %s183
      %p195 = scmp.eq.s32.totalorder %s26, 1
      %p196 = por %p194, %p195
      %p198 = scmp.ne.s32.totalorder %s183, %s197
      %p199 = scmp.eq.s32.totalorder %s26, 0
      %p200 = por %p198, %p199
      %s202 = sadd.s32 %s201, 1
      %p205 = scmp.eq.s32.totalorder %s20, 1
      %p206 = scmp.ne.s32.totalorder %s201, %s203
      %p207 = scmp.eq.s32.totalorder %s20, 0
      %p208 = por %p206, %p207
      %p209 = scmp.ne.s32.totalorder %s201, %s203
      %p210 = scmp.eq.s32.totalorder %s25, 1
      %p211 = por %p209, %p210
      %p212 = scmp.ne.s32.totalorder %s203, %s204
      %p213 = scmp.eq.s32.totalorder %s25, 0
      %p214 = por %p212, %p213
      %p215 = scmp.ne.s32.totalorder %s203, %s204
      %p216 = scmp.eq.s32.totalorder %s26, 1
      %p217 = por %p215, %p216
      %p219 = scmp.ne.s32.totalorder %s204, %s218
      %p220 = scmp.eq.s32.totalorder %s26, 0
      %p221 = por %p219, %p220
      %s223 = sadd.s32 %s222, 1
      %p226 = scmp.eq.s32.totalorder %s20, 1
      %p227 = scmp.ne.s32.totalorder %s222, %s224
      %p228 = scmp.eq.s32.totalorder %s20, 0
      %p229 = por %p227, %p228
      %p230 = scmp.ne.s32.totalorder %s222, %s224
      %p231 = scmp.eq.s32.totalorder %s25, 1
      %p232 = por %p230, %p231
      %p233 = scmp.ne.s32.totalorder %s224, %s225
      %p234 = scmp.eq.s32.totalorder %s25, 0
      %p235 = por %p233, %p234
      %p236 = scmp.ne.s32.totalorder %s224, %s225
      %p237 = scmp.eq.s32.totalorder %s26, 1
      %p238 = por %p236, %p237
      %p240 = scmp.ne.s32.totalorder %s225, %s239
      %p241 = scmp.eq.s32.totalorder %s26, 0
      %p242 = por %p240, %p241
      %s244 = sadd.s32 %s243, 1
      %p247 = scmp.eq.s32.totalorder %s20, 1
      %p248 = scmp.ne.s32.totalorder %s243, %s245
      %p249 = scmp.eq.s32.totalorder %s20, 0
      %p250 = por %p248, %p249
      %p251 = scmp.ne.s32.totalorder %s243, %s245
      %p252 = scmp.eq.s32.totalorder %s25, 1
      %p253 = por %p251, %p252
      %p254 = scmp.ne.s32.totalorder %s245, %s246
      %p255 = scmp.eq.s32.totalorder %s25, 0
      %p256 = por %p254, %p255
      %p257 = scmp.ne.s32.totalorder %s245, %s246
      %p258 = scmp.eq.s32.totalorder %s26, 1
      %p259 = por %p257, %p258
      %p261 = scmp.ne.s32.totalorder %s246, %s260
      %p262 = scmp.eq.s32.totalorder %s26, 0
      %p263 = por %p261, %p262
      %s264 = ssub.s32 %s20, %s27
      %p265 = scmp.eq.s32.totalorder %s264, 0
      %s267 = sadd.s32 %s266, 1
      %s268 = scalar_select %p265, %s266, %s267
      %p271 = pneg %p265
      %p272 = scmp.eq.s32.totalorder %s20, 1
      %p273 = por %p271, %p272
      %p274 = scmp.ne.s32.totalorder %s266, %s269
      %p275 = scmp.eq.s32.totalorder %s20, 0
      %p276 = por %p274, %p275
      %p277 = scmp.ne.s32.totalorder %s266, %s269
      %p278 = scmp.eq.s32.totalorder %s25, 1
      %p279 = por %p277, %p278
      %p280 = scmp.ne.s32.totalorder %s269, %s270
      %p281 = scmp.eq.s32.totalorder %s25, 0
      %p282 = por %p280, %p281
      %p283 = scmp.ne.s32.totalorder %s269, %s270
      %p284 = scmp.eq.s32.totalorder %s26, 1
      %p285 = por %p283, %p284
      %p287 = scmp.ne.s32.totalorder %s270, %s286
      %p288 = scmp.eq.s32.totalorder %s26, 0
      %p289 = por %p287, %p288
      %p290 = scmp.le.s32.totalorder 1, %s20
      %p291 = scmp.lt.s32.totalorder %s20, 3
      %p292 = pnand %p290, %p291
      %p293 = pneg %p292
      // Predicated region
      $region9: #{tpu_custom_call.1} parent=5 // pred_check
        _
      $region10: #{tpu_custom_call.1} parent=5 // pred_check_branch
        %295 = sbr.rel (%p292) target = $region12
      $region11: #{tpu_custom_call.1} parent=5 // pred_region
        %s296 = ssub.s32 %s20, 1
        // Predicated region
        $region13: #{tpu_custom_call.1} parent=11 // pred_check
          %p297 = pneg %p67
        $region14: #{tpu_custom_call.1} parent=11 // pred_check_branch
          %299 = sbr.rel (%p297) target = $region16
        $region15: #{tpu_custom_call.1} parent=11 // pred_region
          _
        $region16: #{tpu_custom_call.1} parent=11 // pred_fallthru
          _
        // Predicated region
        $region17: #{tpu_custom_call.1} parent=11 // pred_check
          %p300 = pneg %p88
        $region18: #{tpu_custom_call.1} parent=11 // pred_check_branch
          %302 = sbr.rel (%p300) target = $region20
        $region19: #{tpu_custom_call.1} parent=11 // pred_region
          _
        $region20: #{tpu_custom_call.1} parent=11 // pred_fallthru
          _
        // Predicated region
        $region21: #{tpu_custom_call.1} parent=11 // pred_check
          %p303 = pneg %p109
        $region22: #{tpu_custom_call.1} parent=11 // pred_check_branch
          %305 = sbr.rel (%p303) target = $region24
        $region23: #{tpu_custom_call.1} parent=11 // pred_region
          _
        $region24: #{tpu_custom_call.1} parent=11 // pred_fallthru
          _
        // Predicated region
        $region25: #{tpu_custom_call.1} parent=11 // pred_check
          %p306 = pneg %p130
        $region26: #{tpu_custom_call.1} parent=11 // pred_check_branch
          %308 = sbr.rel (%p306) target = $region28
        $region27: #{tpu_custom_call.1} parent=11 // pred_region
          _
        $region28: #{tpu_custom_call.1} parent=11 // pred_fallthru
          _
        // Predicated region
        $region29: #{tpu_custom_call.1} parent=11 // pred_check
          %p309 = pneg %p151
        $region30: #{tpu_custom_call.1} parent=11 // pred_check_branch
          %311 = sbr.rel (%p309) target = $region32
        $region31: #{tpu_custom_call.1} parent=11 // pred_region
          _
        $region32: #{tpu_custom_call.1} parent=11 // pred_fallthru
          _
        // Predicated region
        $region33: #{tpu_custom_call.1} parent=11 // pred_check
          %p312 = pneg %p172
        $region34: #{tpu_custom_call.1} parent=11 // pred_check_branch
          %314 = sbr.rel (%p312) target = $region36
        $region35: #{tpu_custom_call.1} parent=11 // pred_region
          _
        $region36: #{tpu_custom_call.1} parent=11 // pred_fallthru
          _
        // Predicated region
        $region37: #{tpu_custom_call.1} parent=11 // pred_check
          %p315 = pneg %p193
        $region38: #{tpu_custom_call.1} parent=11 // pred_check_branch
          %317 = sbr.rel (%p315) target = $region40
        $region39: #{tpu_custom_call.1} parent=11 // pred_region
          _
        $region40: #{tpu_custom_call.1} parent=11 // pred_fallthru
          _
        // Predicated region
        $region41: #{tpu_custom_call.1} parent=11 // pred_check
          %p318 = pneg %p214
        $region42: #{tpu_custom_call.1} parent=11 // pred_check_branch
          %320 = sbr.rel (%p318) target = $region44
        $region43: #{tpu_custom_call.1} parent=11 // pred_region
          _
        $region44: #{tpu_custom_call.1} parent=11 // pred_fallthru
          _
        // Predicated region
        $region45: #{tpu_custom_call.1} parent=11 // pred_check
          %p321 = pneg %p235
        $region46: #{tpu_custom_call.1} parent=11 // pred_check_branch
          %323 = sbr.rel (%p321) target = $region48
        $region47: #{tpu_custom_call.1} parent=11 // pred_region
          _
        $region48: #{tpu_custom_call.1} parent=11 // pred_fallthru
          _
        // Predicated region
        $region49: #{tpu_custom_call.1} parent=11 // pred_check
          %p324 = pneg %p256
        $region50: #{tpu_custom_call.1} parent=11 // pred_check_branch
          %326 = sbr.rel (%p324) target = $region52
        $region51: #{tpu_custom_call.1} parent=11 // pred_region
          _
        $region52: #{tpu_custom_call.1} parent=11 // pred_fallthru
          _
      $region12: #{tpu_custom_call.1} parent=5 // pred_fallthru
        _
      %p327 = scmp.lt.s32.totalorder %s20, 2
      // Predicated region
      $region53: #{tpu_custom_call.1} parent=5 // pred_check
        %p328 = pneg %p327
      $region54: #{tpu_custom_call.1} parent=5 // pred_check_branch
        %330 = sbr.rel (%p328) target = $region56
      $region55: #{tpu_custom_call.1} parent=5 // pred_region
        // Predicated region
        $region57: #{tpu_custom_call.1} parent=55 // pred_check
          %p331 = pneg %p40
        $region58: #{tpu_custom_call.1} parent=55 // pred_check_branch
          %333 = sbr.rel (%p331) target = $region60
        $region59: #{tpu_custom_call.1} parent=55 // pred_region
          %s334 = sand.u32 %s30, 1
          %s335 = sand.u32 %s30, 1
          %s336 = smul.addr %s335, 16
          %s337 = scalar_lea.vmem [#allocation2], %s336
          %s338 = smul.addr %s20, 8
          %s339 = scalar_lea.vmem %s0, %s338
          // Predicated region
          $region61: #{tpu_custom_call.1} parent=59 // pred_check
            _
          $region62: #{tpu_custom_call.1} parent=59 // pred_check_branch
            %341 = sbr.rel (0) target = $region64
          $region63: #{tpu_custom_call.1} parent=59 // pred_region
            // Predicated region
            $region65: #{tpu_custom_call.1} parent=63 // pred_check
              _
            $region66: #{tpu_custom_call.1} parent=63 // pred_check_branch
              %343 = sbr.rel (0) target = $region68
            $region67: #{tpu_custom_call.1} parent=63 // pred_region
              // Predicated region
              $region80: #{tpu_custom_call.1} parent=67 // pred_check
                _
              $region81: #{tpu_custom_call.1} parent=67 // pred_check_branch
                %361 = sbr.rel (0) target = $region83
              $region82: #{tpu_custom_call.1} parent=67 // pred_region
                loop: start=0, step=1, limit=1
                $region84: #{tpu_custom_call.1} parent=82 // loop_pre_header
                  _
                $region85: #{tpu_custom_call.1} parent=82 // loop_header
                  %s363 = sphi 0, %s367
                  %p364 = scmp.ge.s32.totalorder %s363, 1
                  %s368 = sphi %s339, %s339
                  %s369 = sphi %s337, %s337
                $region86: #{tpu_custom_call.1} parent=82 // loop_header_branch
                  %366 = sbr.rel (%p364) target = $region90
                $region87: #{tpu_custom_call.1} parent=82 // loop_body
                  %v370 = vld [vmem:[%s368] sm:$0xff]
                  %371 = vst [vmem:[%s369] sm:$0xff] %v370
                  %v372 = vld [vmem:[%s368 + $0x10] sm:$0xff]
                  %373 = vst [vmem:[%s369 + $0x8] sm:$0xff] %v372
                $region88: #{tpu_custom_call.1} parent=82 // loop_footer
                  %s367 = sadd.s32 1, %s363
                $region89: #{tpu_custom_call.1} parent=82 // loop_footer_branch
                  %362 = sbr.rel target = $region85
                $region90: #{tpu_custom_call.1} parent=82 // loop_exit
                  _
              $region83: #{tpu_custom_call.1} parent=67 // pred_fallthru
                _
              // Predicated region
              $region91: #{tpu_custom_call.1} parent=67 // pred_check
                _
              $region92: #{tpu_custom_call.1} parent=67 // pred_check_branch
                %375 = sbr.rel target = $region94
              $region93: #{tpu_custom_call.1} parent=67 // pred_region
                _
              $region94: #{tpu_custom_call.1} parent=67 // pred_fallthru
                _
            $region68: #{tpu_custom_call.1} parent=63 // pred_fallthru
              _
            // Predicated region
            $region69: #{tpu_custom_call.1} parent=63 // pred_check
              _
            $region70: #{tpu_custom_call.1} parent=63 // pred_check_branch
              %345 = sbr.rel target = $region72
            $region71: #{tpu_custom_call.1} parent=63 // pred_region
              %s347 = ssub.s32 256, 1
              loop: start=0, step=1, limit=1
              $region73: #{tpu_custom_call.1} parent=71 // loop_pre_header
                _
              $region74: #{tpu_custom_call.1} parent=71 // loop_header
                %s349 = sphi 0, %s353
                %p350 = scmp.ge.s32.totalorder %s349, 1
                %s354 = sphi %s339, %s339
                %s355 = sphi %s337, %s337
              $region75: #{tpu_custom_call.1} parent=71 // loop_header_branch
                %352 = sbr.rel (%p350) target = $region79
              $region76: #{tpu_custom_call.1} parent=71 // loop_body
                %v356 = vld [vmem:[%s354] sm:%s347]
                %357 = vst [vmem:[%s355] sm:%s347] %v356
                %v358 = vld [vmem:[%s354 + $0x10] sm:%s347]
                %359 = vst [vmem:[%s355 + $0x8] sm:%s347] %v358
              $region77: #{tpu_custom_call.1} parent=71 // loop_footer
                %s353 = sadd.s32 1, %s349
              $region78: #{tpu_custom_call.1} parent=71 // loop_footer_branch
                %348 = sbr.rel target = $region74
              $region79: #{tpu_custom_call.1} parent=71 // loop_exit
                _
            $region72: #{tpu_custom_call.1} parent=63 // pred_fallthru
              _
          $region64: #{tpu_custom_call.1} parent=59 // pred_fallthru
            _
          %376 = vnop
        $region60: #{tpu_custom_call.1} parent=55 // pred_fallthru
          _
      $region56: #{tpu_custom_call.1} parent=5 // pred_fallthru
        _
      %p377 = scmp.le.s32.totalorder 1, %s20
      %p378 = scmp.lt.s32.totalorder %s20, 3
      %p379 = pnand %p377, %p378
      %p380 = pneg %p379
      // Predicated region
      $region95: #{tpu_custom_call.1} parent=5 // pred_check
        _
      $region96: #{tpu_custom_call.1} parent=5 // pred_check_branch
        %382 = sbr.rel (%p379) target = $region98
      $region97: #{tpu_custom_call.1} parent=5 // pred_region
        %s383 = ssub.s32 %s20, 1
        %s384 = sand.u32 %s33, 1
        %s385 = sand.u32 %s33, 1
        %s386 = smul.addr %s385, 16
        %s387 = scalar_lea.vmem [#allocation2], %s386
        // Predicated region
        $region99: #{tpu_custom_call.1} parent=97 // pred_check
          %p388 = pneg %p46
        $region100: #{tpu_custom_call.1} parent=97 // pred_check_branch
          %390 = sbr.rel (%p388) target = $region102
        $region101: #{tpu_custom_call.1} parent=97 // pred_region
          _
        $region102: #{tpu_custom_call.1} parent=97 // pred_fallthru
          _
        %s391 = sand.u32 %s33, 1
        %s392 = sand.u32 %s33, 1
        %s393 = smul.addr %s392, 16
        %s394 = scalar_lea.vmem [#allocation2], %s393
        %p395 = pneg %p46
        %p396 = pneg %p43
        %p397 = pneg %p67
        %p398 = pneg %p64
        %p399 = pneg %p88
        %p400 = pneg %p85
        %p401 = pneg %p109
        %p402 = pneg %p106
        %p403 = pneg %p130
        %p404 = pneg %p127
        %p405 = pneg %p151
        %p406 = pneg %p148
        %p407 = pneg %p172
        %p408 = pneg %p169
        %p409 = pneg %p193
        %p410 = pneg %p190
        %p411 = pneg %p214
        %p412 = pneg %p211
        %p413 = pneg %p235
        %p414 = pneg %p232
        %p415 = pneg %p256
        %p416 = pneg %p253
        %p417 = pneg %p282
        %p418 = pneg %p279
        %s419 = sand.u32 %s269, 1
        %s420 = scalar_lea.sflag [#allocation4], %s419
        %s421 = sand.u32 %s269, 1
        %s422 = smul.addr %s421, 16
        %s423 = scalar_lea.vmem [#allocation3], %s422
        %v424 = vld [vmem:[%s1] sm:$0xff]
        %v425 = vld [vmem:[%s1 + $0x8] sm:$0xff]
        %v426 = vld [vmem:[%s1 + $0x10] sm:$0xff]
        %v427 = vld [vmem:[%s1 + $0x18] sm:$0xff]
        %v428 = vld [vmem:[%s1 + $0x20] sm:$0xff]
        %v429 = vld [vmem:[%s1 + $0x28] sm:$0xff]
        %v430 = vld [vmem:[%s1 + $0x30] sm:$0xff]
        %v431 = vld [vmem:[%s1 + $0x38] sm:$0xff]
        %v432 = vld [vmem:[%s1 + $0x40] sm:$0xff]
        %v433 = vld [vmem:[%s1 + $0x48] sm:$0xff]
        %v434 = vld [vmem:[%s1 + $0x50] sm:$0xff]
        %v435 = vld [vmem:[%s1 + $0x58] sm:$0xff]
        %v436 = vld [vmem:[%s1 + $0x60] sm:$0xf]
        %v437 = vld [vmem:[%s387] sm:$0xff]
        %v438 = vld [vmem:[%s387 + $0x8] sm:$0x3]
        %v439 = vld [vmem:[%s2] sm:$0xff]
        %v440 = vld [vmem:[%s2 + $0x8] sm:$0xff]
        %v441 = vld [vmem:[%s2 + $0x10] sm:$0xff]
        %v442 = vld [vmem:[%s2 + $0x18] sm:$0xff]
        %v443 = vld [vmem:[%s2 + $0x20] sm:$0xff]
        %v444 = vld [vmem:[%s2 + $0x28] sm:$0xff]
        %v445 = vld [vmem:[%s2 + $0x30] sm:$0xff]
        %v446 = vld [vmem:[%s2 + $0x38] sm:$0xff]
        %v447 = vld [vmem:[%s2 + $0x40] sm:$0xff]
        %v448 = vld [vmem:[%s2 + $0x48] sm:$0xff]
        %v449 = vld [vmem:[%s2 + $0x50] sm:$0xff]
        %v450 = vld [vmem:[%s2 + $0x58] sm:$0xff]
        %v451 = vld [vmem:[%s2 + $0x60] sm:$0xf]
        %453 = vset.pattern.permute.xlu0 0
        %454 = vperm.xlu0 %453, %v439
        %v455 = vpop.permute.xlu0 %454
        %458 = vset.pattern.permute.xlu0 0
        %459 = vperm.xlu0 %458, %v440
        %v460 = vpop.permute.xlu0 %459
        %463 = vset.pattern.permute.xlu0 0
        %464 = vperm.xlu0 %463, %v441
        %v465 = vpop.permute.xlu0 %464
        %468 = vset.pattern.permute.xlu0 0
        %469 = vperm.xlu0 %468, %v442
        %v470 = vpop.permute.xlu0 %469
        %473 = vset.pattern.permute.xlu0 0
        %474 = vperm.xlu0 %473, %v443
        %v475 = vpop.permute.xlu0 %474
        %478 = vset.pattern.permute.xlu0 0
        %479 = vperm.xlu0 %478, %v444
        %v480 = vpop.permute.xlu0 %479
        %483 = vset.pattern.permute.xlu0 0
        %484 = vperm.xlu0 %483, %v445
        %v485 = vpop.permute.xlu0 %484
        %488 = vset.pattern.permute.xlu0 0
        %489 = vperm.xlu0 %488, %v446
        %v490 = vpop.permute.xlu0 %489
        %493 = vset.pattern.permute.xlu0 0
        %494 = vperm.xlu0 %493, %v447
        %v495 = vpop.permute.xlu0 %494
        %498 = vset.pattern.permute.xlu0 0
        %499 = vperm.xlu0 %498, %v448
        %v500 = vpop.permute.xlu0 %499
        %503 = vset.pattern.permute.xlu0 0
        %504 = vperm.xlu0 %503, %v449
        %v505 = vpop.permute.xlu0 %504
        %508 = vset.pattern.permute.xlu0 0
        %509 = vperm.xlu0 %508, %v450
        %v510 = vpop.permute.xlu0 %509
        %513 = vset.pattern.permute.xlu0 0
        %514 = vperm.xlu0 %513, %v451
        %v515 = vpop.permute.xlu0 %514
        %vm517 = vcmask 80896
        %v519 = vsel %vm517, %v424, 0
        %v522 = vsel %vm517, %v425, 0
        %v525 = vsel %vm517, %v426, 0
        %v528 = vsel %vm517, %v427, 0
        %v531 = vsel %vm517, %v428, 0
        %v534 = vsel %vm517, %v429, 0
        %v537 = vsel %vm517, %v430, 0
        %v540 = vsel %vm517, %v431, 0
        %v543 = vsel %vm517, %v432, 0
        %v546 = vsel %vm517, %v433, 0
        %v549 = vsel %vm517, %v434, 0
        %v552 = vsel %vm517, %v435, 0
        %v555 = vsel %vm517, %v436, 0
        %vm557 = vcmask 1041408
        %v559 = vsel %vm557, %v438, 0
        %561 = vmatpush.msra.mxu0 0.0
        %562 = vmatpush.msra.mxu0 0.0
        %563 = vmatpush.msra.mxu0 0.0
        %564 = vmatpush.msra.mxu0 0.0
        %565 = vmatpush.msra.mxu0 0.0
        %566 = vmatpush.msra.mxu0 0.0
        %567 = vmatpush.msra.mxu0 0.0
        %568 = vmatpush.msra.mxu0 0.0
        %569 = vmatpush.msra.mxu0 0.0
        %570 = vmatpush.msra.mxu0 0.0
        %571 = vmatpush.msra.mxu0 0.0
        %572 = vmatpush.msra.mxu0 0.0
        %573 = vmatpush.msra.mxu0 0.0
        %574 = vmatpush.msra.mxu0 0.0
        %575 = vmatpush.msra.mxu0 %v559
        %576 = vmatpush.msra.mxu0 %v437
        %577 = vmatmul.f32.gmra.mxu0 %v519
        %v578 = vpop.f32.mrf.mxu0
        %v579 = vadd.f32 %v455, %v578
        %580 = vmatmul.f32.gmra.mxu0 %v522
        %v581 = vpop.f32.mrf.mxu0
        %v582 = vadd.f32 %v460, %v581
        %583 = vmatmul.f32.gmra.mxu0 %v525
        %v584 = vpop.f32.mrf.mxu0
        %v585 = vadd.f32 %v465, %v584
        %586 = vmatmul.f32.gmra.mxu0 %v528
        %v587 = vpop.f32.mrf.mxu0
        %v588 = vadd.f32 %v470, %v587
        %589 = vmatmul.f32.gmra.mxu0 %v531
        %v590 = vpop.f32.mrf.mxu0
        %v591 = vadd.f32 %v475, %v590
        %592 = vmatmul.f32.gmra.mxu0 %v534
        %v593 = vpop.f32.mrf.mxu0
        %v594 = vadd.f32 %v480, %v593
        %595 = vmatmul.f32.gmra.mxu0 %v537
        %v596 = vpop.f32.mrf.mxu0
        %v597 = vadd.f32 %v485, %v596
        %598 = vmatmul.f32.gmra.mxu0 %v540
        %v599 = vpop.f32.mrf.mxu0
        %v600 = vadd.f32 %v490, %v599
        %601 = vmatmul.f32.gmra.mxu0 %v543
        %v602 = vpop.f32.mrf.mxu0
        %v603 = vadd.f32 %v495, %v602
        %604 = vmatmul.f32.gmra.mxu0 %v546
        %v605 = vpop.f32.mrf.mxu0
        %v606 = vadd.f32 %v500, %v605
        %607 = vmatmul.f32.gmra.mxu0 %v549
        %v608 = vpop.f32.mrf.mxu0
        %v609 = vadd.f32 %v505, %v608
        %610 = vmatmul.f32.gmra.mxu0 %v552
        %v611 = vpop.f32.mrf.mxu0
        %v612 = vadd.f32 %v510, %v611
        %613 = vmatmul.f32.gmra.mxu0 %v555
        %v614 = vpop.f32.mrf.mxu0
        %v615 = vadd.f32 %v515, %v614
        %616 = vdwg.mxu0
        %v617 = vmax.f32 %v579, 0.0
        %v618 = vmax.f32 %v582, 0.0
        %v619 = vmax.f32 %v585, 0.0
        %v620 = vmax.f32 %v588, 0.0
        %v621 = vmax.f32 %v591, 0.0
        %v622 = vmax.f32 %v594, 0.0
        %v623 = vmax.f32 %v597, 0.0
        %v624 = vmax.f32 %v600, 0.0
        %v625 = vmax.f32 %v603, 0.0
        %v626 = vmax.f32 %v606, 0.0
        %v627 = vmax.f32 %v609, 0.0
        %v628 = vmax.f32 %v612, 0.0
        %v629 = vmax.f32 %v615, 0.0
        %v630 = vld [vmem:[%s3] sm:$0xff]
        %v631 = vld [vmem:[%s3 + $0x8] sm:$0xff]
        %v632 = vld [vmem:[%s3 + $0x10] sm:$0xff]
        %v633 = vld [vmem:[%s3 + $0x18] sm:$0xff]
        %v634 = vld [vmem:[%s3 + $0x20] sm:$0xff]
        %v635 = vld [vmem:[%s3 + $0x28] sm:$0xff]
        %v636 = vld [vmem:[%s3 + $0x30] sm:$0xff]
        %v637 = vld [vmem:[%s3 + $0x38] sm:$0xff]
        %v638 = vld [vmem:[%s3 + $0x40] sm:$0xff]
        %v639 = vld [vmem:[%s3 + $0x48] sm:$0xff]
        %v640 = vld [vmem:[%s3 + $0x50] sm:$0xff]
        %v641 = vld [vmem:[%s3 + $0x58] sm:$0xff]
        %v642 = vld [vmem:[%s3 + $0x60] sm:$0xf]
        %v643 = vld [vmem:[%s4] sm:$0xff]
        %v644 = vld [vmem:[%s4 + $0x8] sm:$0xff]
        %v645 = vld [vmem:[%s4 + $0x10] sm:$0xff]
        %v646 = vld [vmem:[%s4 + $0x18] sm:$0xff]
        %v647 = vld [vmem:[%s4 + $0x20] sm:$0xff]
        %v648 = vld [vmem:[%s4 + $0x28] sm:$0xff]
        %v649 = vld [vmem:[%s4 + $0x30] sm:$0xff]
        %v650 = vld [vmem:[%s4 + $0x38] sm:$0xff]
        %v651 = vld [vmem:[%s4 + $0x40] sm:$0xff]
        %v652 = vld [vmem:[%s4 + $0x48] sm:$0xff]
        %v653 = vld [vmem:[%s4 + $0x50] sm:$0xff]
        %v654 = vld [vmem:[%s4 + $0x58] sm:$0xff]
        %v655 = vld [vmem:[%s4 + $0x60] sm:$0xf]
        %657 = vset.pattern.permute.xlu0 0
        %658 = vperm.xlu0 %657, %v643
        %v659 = vpop.permute.xlu0 %658
        %662 = vset.pattern.permute.xlu0 0
        %663 = vperm.xlu0 %662, %v644
        %v664 = vpop.permute.xlu0 %663
        %667 = vset.pattern.permute.xlu0 0
        %668 = vperm.xlu0 %667, %v645
        %v669 = vpop.permute.xlu0 %668
        %672 = vset.pattern.permute.xlu0 0
        %673 = vperm.xlu0 %672, %v646
        %v674 = vpop.permute.xlu0 %673
        %677 = vset.pattern.permute.xlu0 0
        %678 = vperm.xlu0 %677, %v647
        %v679 = vpop.permute.xlu0 %678
        %682 = vset.pattern.permute.xlu0 0
        %683 = vperm.xlu0 %682, %v648
        %v684 = vpop.permute.xlu0 %683
        %687 = vset.pattern.permute.xlu0 0
        %688 = vperm.xlu0 %687, %v649
        %v689 = vpop.permute.xlu0 %688
        %692 = vset.pattern.permute.xlu0 0
        %693 = vperm.xlu0 %692, %v650
        %v694 = vpop.permute.xlu0 %693
        %697 = vset.pattern.permute.xlu0 0
        %698 = vperm.xlu0 %697, %v651
        %v699 = vpop.permute.xlu0 %698
        %702 = vset.pattern.permute.xlu0 0
        %703 = vperm.xlu0 %702, %v652
        %v704 = vpop.permute.xlu0 %703
        %707 = vset.pattern.permute.xlu0 0
        %708 = vperm.xlu0 %707, %v653
        %v709 = vpop.permute.xlu0 %708
        %712 = vset.pattern.permute.xlu0 0
        %713 = vperm.xlu0 %712, %v654
        %v714 = vpop.permute.xlu0 %713
        %717 = vset.pattern.permute.xlu0 0
        %718 = vperm.xlu0 %717, %v655
        %v719 = vpop.permute.xlu0 %718
        %vm721 = vcmask 818176
        %v723 = vsel %vm721, %v630, 0
        %v726 = vsel %vm721, %v631, 0
        %v729 = vsel %vm721, %v632, 0
        %v732 = vsel %vm721, %v633, 0
        %v735 = vsel %vm721, %v634, 0
        %v738 = vsel %vm721, %v635, 0
        %v741 = vsel %vm721, %v636, 0
        %v744 = vsel %vm721, %v637, 0
        %v747 = vsel %vm721, %v638, 0
        %v750 = vsel %vm721, %v639, 0
        %v753 = vsel %vm721, %v640, 0
        %v756 = vsel %vm721, %v641, 0
        %v759 = vsel %vm721, %v642, 0
        %vm761 = vcmask 1043456
        %v763 = vsel %vm761, %v629, 0
        %765 = vmatpush.msra.mxu0 0.0
        %766 = vmatpush.msra.mxu0 0.0
        %767 = vmatpush.msra.mxu0 0.0
        %768 = vmatpush.msra.mxu0 %v763
        %769 = vmatpush.msra.mxu0 %v628
        %770 = vmatpush.msra.mxu0 %v627
        %771 = vmatpush.msra.mxu0 %v626
        %772 = vmatpush.msra.mxu0 %v625
        %773 = vmatpush.msra.mxu0 %v624
        %774 = vmatpush.msra.mxu0 %v623
        %775 = vmatpush.msra.mxu0 %v622
        %776 = vmatpush.msra.mxu0 %v621
        %777 = vmatpush.msra.mxu0 %v620
        %778 = vmatpush.msra.mxu0 %v619
        %779 = vmatpush.msra.mxu0 %v618
        %780 = vmatpush.msra.mxu0 %v617
        %781 = vmatmul.f32.gmra.mxu0 %v723
        %v782 = vpop.f32.mrf.mxu0
        %v783 = vadd.f32 %v659, %v782
        %784 = vmatmul.f32.gmra.mxu0 %v726
        %v785 = vpop.f32.mrf.mxu0
        %v786 = vadd.f32 %v664, %v785
        %787 = vmatmul.f32.gmra.mxu0 %v729
        %v788 = vpop.f32.mrf.mxu0
        %v789 = vadd.f32 %v669, %v788
        %790 = vmatmul.f32.gmra.mxu0 %v732
        %v791 = vpop.f32.mrf.mxu0
        %v792 = vadd.f32 %v674, %v791
        %793 = vmatmul.f32.gmra.mxu0 %v735
        %v794 = vpop.f32.mrf.mxu0
        %v795 = vadd.f32 %v679, %v794
        %796 = vmatmul.f32.gmra.mxu0 %v738
        %v797 = vpop.f32.mrf.mxu0
        %v798 = vadd.f32 %v684, %v797
        %799 = vmatmul.f32.gmra.mxu0 %v741
        %v800 = vpop.f32.mrf.mxu0
        %v801 = vadd.f32 %v689, %v800
        %802 = vmatmul.f32.gmra.mxu0 %v744
        %v803 = vpop.f32.mrf.mxu0
        %v804 = vadd.f32 %v694, %v803
        %805 = vmatmul.f32.gmra.mxu0 %v747
        %v806 = vpop.f32.mrf.mxu0
        %v807 = vadd.f32 %v699, %v806
        %808 = vmatmul.f32.gmra.mxu0 %v750
        %v809 = vpop.f32.mrf.mxu0
        %v810 = vadd.f32 %v704, %v809
        %811 = vmatmul.f32.gmra.mxu0 %v753
        %v812 = vpop.f32.mrf.mxu0
        %v813 = vadd.f32 %v709, %v812
        %814 = vmatmul.f32.gmra.mxu0 %v756
        %v815 = vpop.f32.mrf.mxu0
        %v816 = vadd.f32 %v714, %v815
        %817 = vmatmul.f32.gmra.mxu0 %v759
        %v818 = vpop.f32.mrf.mxu0
        %v819 = vadd.f32 %v719, %v818
        %820 = vdwg.mxu0
        %v821 = vmax.f32 %v783, 0.0
        %v822 = vmax.f32 %v786, 0.0
        %v823 = vmax.f32 %v789, 0.0
        %v824 = vmax.f32 %v792, 0.0
        %v825 = vmax.f32 %v795, 0.0
        %v826 = vmax.f32 %v798, 0.0
        %v827 = vmax.f32 %v801, 0.0
        %v828 = vmax.f32 %v804, 0.0
        %v829 = vmax.f32 %v807, 0.0
        %v830 = vmax.f32 %v810, 0.0
        %v831 = vmax.f32 %v813, 0.0
        %v832 = vmax.f32 %v816, 0.0
        %v833 = vmax.f32 %v819, 0.0
        %v834 = vld [vmem:[%s5] sm:$0xff]
        %v835 = vld [vmem:[%s5 + $0x8] sm:$0xff]
        %v836 = vld [vmem:[%s5 + $0x10] sm:$0xff]
        %v837 = vld [vmem:[%s5 + $0x18] sm:$0xff]
        %v838 = vld [vmem:[%s5 + $0x20] sm:$0xff]
        %v839 = vld [vmem:[%s5 + $0x28] sm:$0xff]
        %v840 = vld [vmem:[%s5 + $0x30] sm:$0xff]
        %v841 = vld [vmem:[%s5 + $0x38] sm:$0xff]
        %v842 = vld [vmem:[%s5 + $0x40] sm:$0xff]
        %v843 = vld [vmem:[%s5 + $0x48] sm:$0xff]
        %v844 = vld [vmem:[%s5 + $0x50] sm:$0xff]
        %v845 = vld [vmem:[%s5 + $0x58] sm:$0xff]
        %v846 = vld [vmem:[%s5 + $0x60] sm:$0xf]
        %v847 = vld [vmem:[%s6] sm:$0xff]
        %v848 = vld [vmem:[%s6 + $0x8] sm:$0xff]
        %v849 = vld [vmem:[%s6 + $0x10] sm:$0xff]
        %v850 = vld [vmem:[%s6 + $0x18] sm:$0xff]
        %v851 = vld [vmem:[%s6 + $0x20] sm:$0xff]
        %v852 = vld [vmem:[%s6 + $0x28] sm:$0xff]
        %v853 = vld [vmem:[%s6 + $0x30] sm:$0xff]
        %v854 = vld [vmem:[%s6 + $0x38] sm:$0xff]
        %v855 = vld [vmem:[%s6 + $0x40] sm:$0xff]
        %v856 = vld [vmem:[%s6 + $0x48] sm:$0xff]
        %v857 = vld [vmem:[%s6 + $0x50] sm:$0xff]
        %v858 = vld [vmem:[%s6 + $0x58] sm:$0xff]
        %v859 = vld [vmem:[%s6 + $0x60] sm:$0xf]
        %861 = vset.pattern.permute.xlu0 0
        %862 = vperm.xlu0 %861, %v847
        %v863 = vpop.permute.xlu0 %862
        %866 = vset.pattern.permute.xlu0 0
        %867 = vperm.xlu0 %866, %v848
        %v868 = vpop.permute.xlu0 %867
        %871 = vset.pattern.permute.xlu0 0
        %872 = vperm.xlu0 %871, %v849
        %v873 = vpop.permute.xlu0 %872
        %876 = vset.pattern.permute.xlu0 0
        %877 = vperm.xlu0 %876, %v850
        %v878 = vpop.permute.xlu0 %877
        %881 = vset.pattern.permute.xlu0 0
        %882 = vperm.xlu0 %881, %v851
        %v883 = vpop.permute.xlu0 %882
        %886 = vset.pattern.permute.xlu0 0
        %887 = vperm.xlu0 %886, %v852
        %v888 = vpop.permute.xlu0 %887
        %891 = vset.pattern.permute.xlu0 0
        %892 = vperm.xlu0 %891, %v853
        %v893 = vpop.permute.xlu0 %892
        %896 = vset.pattern.permute.xlu0 0
        %897 = vperm.xlu0 %896, %v854
        %v898 = vpop.permute.xlu0 %897
        %901 = vset.pattern.permute.xlu0 0
        %902 = vperm.xlu0 %901, %v855
        %v903 = vpop.permute.xlu0 %902
        %906 = vset.pattern.permute.xlu0 0
        %907 = vperm.xlu0 %906, %v856
        %v908 = vpop.permute.xlu0 %907
        %911 = vset.pattern.permute.xlu0 0
        %912 = vperm.xlu0 %911, %v857
        %v913 = vpop.permute.xlu0 %912
        %916 = vset.pattern.permute.xlu0 0
        %917 = vperm.xlu0 %916, %v858
        %v918 = vpop.permute.xlu0 %917
        %921 = vset.pattern.permute.xlu0 0
        %922 = vperm.xlu0 %921, %v859
        %v923 = vpop.permute.xlu0 %922
        %v926 = vsel %vm721, %v834, 0
        %v929 = vsel %vm721, %v835, 0
        %v932 = vsel %vm721, %v836, 0
        %v935 = vsel %vm721, %v837, 0
        %v938 = vsel %vm721, %v838, 0
        %v941 = vsel %vm721, %v839, 0
        %v944 = vsel %vm721, %v840, 0
        %v947 = vsel %vm721, %v841, 0
        %v950 = vsel %vm721, %v842, 0
        %v953 = vsel %vm721, %v843, 0
        %v956 = vsel %vm721, %v844, 0
        %v959 = vsel %vm721, %v845, 0
        %v962 = vsel %vm721, %v846, 0
        %v965 = vsel %vm761, %v833, 0
        %967 = vmatpush.msra.mxu0 0.0
        %968 = vmatpush.msra.mxu0 0.0
        %969 = vmatpush.msra.mxu0 0.0
        %970 = vmatpush.msra.mxu0 %v965
        %971 = vmatpush.msra.mxu0 %v832
        %972 = vmatpush.msra.mxu0 %v831
        %973 = vmatpush.msra.mxu0 %v830
        %974 = vmatpush.msra.mxu0 %v829
        %975 = vmatpush.msra.mxu0 %v828
        %976 = vmatpush.msra.mxu0 %v827
        %977 = vmatpush.msra.mxu0 %v826
        %978 = vmatpush.msra.mxu0 %v825
        %979 = vmatpush.msra.mxu0 %v824
        %980 = vmatpush.msra.mxu0 %v823
        %981 = vmatpush.msra.mxu0 %v822
        %982 = vmatpush.msra.mxu0 %v821
        %983 = vmatmul.f32.gmra.mxu0 %v926
        %v984 = vpop.f32.mrf.mxu0
        %v985 = vadd.f32 %v863, %v984
        %986 = vmatmul.f32.gmra.mxu0 %v929
        %v987 = vpop.f32.mrf.mxu0
        %v988 = vadd.f32 %v868, %v987
        %989 = vmatmul.f32.gmra.mxu0 %v932
        %v990 = vpop.f32.mrf.mxu0
        %v991 = vadd.f32 %v873, %v990
        %992 = vmatmul.f32.gmra.mxu0 %v935
        %v993 = vpop.f32.mrf.mxu0
        %v994 = vadd.f32 %v878, %v993
        %995 = vmatmul.f32.gmra.mxu0 %v938
        %v996 = vpop.f32.mrf.mxu0
        %v997 = vadd.f32 %v883, %v996
        %998 = vmatmul.f32.gmra.mxu0 %v941
        %v999 = vpop.f32.mrf.mxu0
        %v1000 = vadd.f32 %v888, %v999
        %1001 = vmatmul.f32.gmra.mxu0 %v944
        %v1002 = vpop.f32.mrf.mxu0
        %v1003 = vadd.f32 %v893, %v1002
        %1004 = vmatmul.f32.gmra.mxu0 %v947
        %v1005 = vpop.f32.mrf.mxu0
        %v1006 = vadd.f32 %v898, %v1005
        %1007 = vmatmul.f32.gmra.mxu0 %v950
        %v1008 = vpop.f32.mrf.mxu0
        %v1009 = vadd.f32 %v903, %v1008
        %1010 = vmatmul.f32.gmra.mxu0 %v953
        %v1011 = vpop.f32.mrf.mxu0
        %v1012 = vadd.f32 %v908, %v1011
        %1013 = vmatmul.f32.gmra.mxu0 %v956
        %v1014 = vpop.f32.mrf.mxu0
        %v1015 = vadd.f32 %v913, %v1014
        %1016 = vmatmul.f32.gmra.mxu0 %v959
        %v1017 = vpop.f32.mrf.mxu0
        %v1018 = vadd.f32 %v918, %v1017
        %1019 = vmatmul.f32.gmra.mxu0 %v962
        %v1020 = vpop.f32.mrf.mxu0
        %v1021 = vadd.f32 %v923, %v1020
        %1022 = vdwg.mxu0
        %v1023 = vmax.f32 %v985, 0.0
        %v1024 = vmax.f32 %v988, 0.0
        %v1025 = vmax.f32 %v991, 0.0
        %v1026 = vmax.f32 %v994, 0.0
        %v1027 = vmax.f32 %v997, 0.0
        %v1028 = vmax.f32 %v1000, 0.0
        %v1029 = vmax.f32 %v1003, 0.0
        %v1030 = vmax.f32 %v1006, 0.0
        %v1031 = vmax.f32 %v1009, 0.0
        %v1032 = vmax.f32 %v1012, 0.0
        %v1033 = vmax.f32 %v1015, 0.0
        %v1034 = vmax.f32 %v1018, 0.0
        %v1035 = vmax.f32 %v1021, 0.0
        %v1036 = vld [vmem:[%s7] sm:$0xff]
        %v1037 = vld [vmem:[%s7 + $0x8] sm:$0xff]
        %v1038 = vld [vmem:[%s7 + $0x10] sm:$0xff]
        %v1039 = vld [vmem:[%s7 + $0x18] sm:$0xff]
        %v1040 = vld [vmem:[%s7 + $0x20] sm:$0xff]
        %v1041 = vld [vmem:[%s7 + $0x28] sm:$0xff]
        %v1042 = vld [vmem:[%s7 + $0x30] sm:$0x3]
        %v1043 = vld [vmem:[%s8] sm:$0xff]
        %v1044 = vld [vmem:[%s8 + $0x8] sm:$0xff]
        %v1045 = vld [vmem:[%s8 + $0x10] sm:$0xff]
        %v1046 = vld [vmem:[%s8 + $0x18] sm:$0xff]
        %v1047 = vld [vmem:[%s8 + $0x20] sm:$0xff]
        %v1048 = vld [vmem:[%s8 + $0x28] sm:$0xff]
        %v1049 = vld [vmem:[%s8 + $0x30] sm:$0x3]
        %1051 = vset.pattern.permute.xlu0 0
        %1052 = vperm.xlu0 %1051, %v1043
        %v1053 = vpop.permute.xlu0 %1052
        %1056 = vset.pattern.permute.xlu0 0
        %1057 = vperm.xlu0 %1056, %v1044
        %v1058 = vpop.permute.xlu0 %1057
        %1061 = vset.pattern.permute.xlu0 0
        %1062 = vperm.xlu0 %1061, %v1045
        %v1063 = vpop.permute.xlu0 %1062
        %1066 = vset.pattern.permute.xlu0 0
        %1067 = vperm.xlu0 %1066, %v1046
        %v1068 = vpop.permute.xlu0 %1067
        %1071 = vset.pattern.permute.xlu0 0
        %1072 = vperm.xlu0 %1071, %v1047
        %v1073 = vpop.permute.xlu0 %1072
        %1076 = vset.pattern.permute.xlu0 0
        %1077 = vperm.xlu0 %1076, %v1048
        %v1078 = vpop.permute.xlu0 %1077
        %1081 = vset.pattern.permute.xlu0 0
        %1082 = vperm.xlu0 %1081, %v1049
        %v1083 = vpop.permute.xlu0 %1082
        %v1086 = vsel %vm721, %v1036, 0
        %v1089 = vsel %vm721, %v1037, 0
        %v1092 = vsel %vm721, %v1038, 0
        %v1095 = vsel %vm721, %v1039, 0
        %v1098 = vsel %vm721, %v1040, 0
        %v1101 = vsel %vm721, %v1041, 0
        %v1104 = vsel %vm721, %v1042, 0
        %v1107 = vsel %vm761, %v1035, 0
        %1109 = vmatpush.msra.mxu0 0.0
        %1110 = vmatpush.msra.mxu0 0.0
        %1111 = vmatpush.msra.mxu0 0.0
        %1112 = vmatpush.msra.mxu0 %v1107
        %1113 = vmatpush.msra.mxu0 %v1034
        %1114 = vmatpush.msra.mxu0 %v1033
        %1115 = vmatpush.msra.mxu0 %v1032
        %1116 = vmatpush.msra.mxu0 %v1031
        %1117 = vmatpush.msra.mxu0 %v1030
        %1118 = vmatpush.msra.mxu0 %v1029
        %1119 = vmatpush.msra.mxu0 %v1028
        %1120 = vmatpush.msra.mxu0 %v1027
        %1121 = vmatpush.msra.mxu0 %v1026
        %1122 = vmatpush.msra.mxu0 %v1025
        %1123 = vmatpush.msra.mxu0 %v1024
        %1124 = vmatpush.msra.mxu0 %v1023
        %1125 = vmatmul.f32.gmra.mxu0 %v1086
        %v1126 = vpop.f32.mrf.mxu0
        %v1127 = vadd.f32 %v1053, %v1126
        %1128 = vmatmul.f32.gmra.mxu0 %v1089
        %v1129 = vpop.f32.mrf.mxu0
        %v1130 = vadd.f32 %v1058, %v1129
        %1131 = vmatmul.f32.gmra.mxu0 %v1092
        %v1132 = vpop.f32.mrf.mxu0
        %v1133 = vadd.f32 %v1063, %v1132
        %1134 = vmatmul.f32.gmra.mxu0 %v1095
        %v1135 = vpop.f32.mrf.mxu0
        %v1136 = vadd.f32 %v1068, %v1135
        %1137 = vmatmul.f32.gmra.mxu0 %v1098
        %v1138 = vpop.f32.mrf.mxu0
        %v1139 = vadd.f32 %v1073, %v1138
        %1140 = vmatmul.f32.gmra.mxu0 %v1101
        %v1141 = vpop.f32.mrf.mxu0
        %v1142 = vadd.f32 %v1078, %v1141
        %1143 = vmatmul.f32.gmra.mxu0 %v1104
        %v1144 = vpop.f32.mrf.mxu0
        %v1145 = vadd.f32 %v1083, %v1144
        %1146 = vdwg.mxu0
        %v1147 = vmax.f32 %v1127, 0.0
        %v1148 = vmax.f32 %v1130, 0.0
        %v1149 = vmax.f32 %v1133, 0.0
        %v1150 = vmax.f32 %v1136, 0.0
        %v1151 = vmax.f32 %v1139, 0.0
        %v1152 = vmax.f32 %v1142, 0.0
        %v1153 = vmax.f32 %v1145, 0.0
        %v1154 = vld [vmem:[%s9] sm:$0xff]
        %v1155 = vld [vmem:[%s9 + $0x8] sm:$0x3]
        %v1156 = vld [vmem:[%s10] sm:$0xff]
        %v1157 = vld [vmem:[%s10 + $0x8] sm:$0x3]
        %1159 = vset.pattern.permute.xlu0 0
        %1160 = vperm.xlu0 %1159, %v1156
        %v1161 = vpop.permute.xlu0 %1160
        %1164 = vset.pattern.permute.xlu0 0
        %1165 = vperm.xlu0 %1164, %v1157
        %v1166 = vpop.permute.xlu0 %1165
        %vm1168 = vcmask 408576
        %v1170 = vsel %vm1168, %v1154, 0
        %v1173 = vsel %vm1168, %v1155, 0
        %v1176 = vsel %vm557, %v1153, 0
        %1178 = vmatpush.msra.mxu0 0.0
        %1179 = vmatpush.msra.mxu0 0.0
        %1180 = vmatpush.msra.mxu0 0.0
        %1181 = vmatpush.msra.mxu0 0.0
        %1182 = vmatpush.msra.mxu0 0.0
        %1183 = vmatpush.msra.mxu0 0.0
        %1184 = vmatpush.msra.mxu0 0.0
        %1185 = vmatpush.msra.mxu0 0.0
        %1186 = vmatpush.msra.mxu0 0.0
        %1187 = vmatpush.msra.mxu0 %v1176
        %1188 = vmatpush.msra.mxu0 %v1152
        %1189 = vmatpush.msra.mxu0 %v1151
        %1190 = vmatpush.msra.mxu0 %v1150
        %1191 = vmatpush.msra.mxu0 %v1149
        %1192 = vmatpush.msra.mxu0 %v1148
        %1193 = vmatpush.msra.mxu0 %v1147
        %1194 = vmatmul.f32.gmra.mxu0 %v1170
        %v1195 = vpop.f32.mrf.mxu0
        %v1196 = vadd.f32 %v1161, %v1195
        %1197 = vmatmul.f32.gmra.mxu0 %v1173
        %v1198 = vpop.f32.mrf.mxu0
        %v1199 = vadd.f32 %v1166, %v1198
        %1200 = vdwg.mxu0
        %1201 = vst [vmem:[%s423] sm:$0xff] %v1196
        %1202 = vst [vmem:[%s423 + $0x8] sm:$0x3] %v1199
        %s1203 = sand.u32 %s269, 1
        %s1204 = scalar_lea.sflag [#allocation4], %s1203
        %s1205 = sand.u32 %s269, 1
        %s1206 = smul.addr %s1205, 16
        %s1207 = scalar_lea.vmem [#allocation3], %s1206
        // Predicated region
        $region103: #{tpu_custom_call.1} parent=97 // pred_check
          %p1208 = pneg %p279
        $region104: #{tpu_custom_call.1} parent=97 // pred_check_branch
          %1210 = sbr.rel (%p1208) target = $region106
        $region105: #{tpu_custom_call.1} parent=97 // pred_region
          %1212 = vsyncadd %s1204, 0
          %s1213 = smul.addr %s25, 8
          %s1214 = scalar_lea.hbm %s11, %s1213
          %s1215 = sshll.u32 %s1207, 4
          %s1216 = int_to_ptr.vmem [resolvable:$true] %s1215
          %s1217 = sshll.u32 %s1214, 4
          %s1218 = int_to_ptr.hbm [resolvable:$true] %s1217
          %1223 = dma.vmem_to_hbm [thread:$0]  %s1216, 256, %s1218, %s1204, 128, 256, 8
        $region106: #{tpu_custom_call.1} parent=97 // pred_fallthru
          _
      $region98: #{tpu_custom_call.1} parent=5 // pred_fallthru
        _
      %p1224 = scmp.le.s32.totalorder 2, %s20
      // Predicated region
      $region107: #{tpu_custom_call.1} parent=5 // pred_check
        %p1225 = pneg %p1224
      $region108: #{tpu_custom_call.1} parent=5 // pred_check_branch
        %1227 = sbr.rel (%p1225) target = $region110
      $region109: #{tpu_custom_call.1} parent=5 // pred_region
        %s1228 = ssub.s32 %s20, 2
        // Predicated region
        $region111: #{tpu_custom_call.1} parent=109 // pred_check
          %p1229 = pneg %p285
        $region112: #{tpu_custom_call.1} parent=109 // pred_check_branch
          %1231 = sbr.rel (%p1229) target = $region114
        $region113: #{tpu_custom_call.1} parent=109 // pred_region
          %s1232 = sand.u32 %s270, 1
          %s1233 = scalar_lea.sflag [#allocation4], %s1232
          %s1234 = sand.u32 %s270, 1
          %s1235 = smul.addr %s1234, 16
          %s1236 = scalar_lea.vmem [#allocation3], %s1235
          %1238 = dma.done %s1233, 256
        $region114: #{tpu_custom_call.1} parent=109 // pred_fallthru
          _
      $region110: #{tpu_custom_call.1} parent=5 // pred_fallthru
        _
    $region6: #{tpu_custom_call.1} parent=1 // loop_footer
      %s24 = sadd.s32 1, %s20
    $region7: #{tpu_custom_call.1} parent=1 // loop_footer_branch
      %19 = sbr.rel target = $region3
    $region8: #{tpu_custom_call.1} parent=1 // loop_exit
      _
    %1239 = vsyncpa [#allocation4], 1
    %s1240 = scalar_lea.sflag [#allocation4], 1
    %1241 = vsyncpa %s1240, 1

</llo_original>
